<compile_context>
chip_gen: v7x
topology: tpu7x:2x2x1
jax: 0.10.0
libtpu: 0.0.40
codegen_flags: <defaults>
</compile_context>

<pallas_src>
import numpy as np
import jax
import jax.numpy as jnp
from jax.experimental import pallas as pl
from jax.experimental.pallas import tpu as pltpu

_A_LIST = [[], [1.0], [1.0, 1.0], [1.0, 2.0, 1.0], [1.0, 3.0, 3.0, 1.0],
           [1.0, 4.0, 6.0, 4.0, 1.0], [1.0, 5.0, 10.0, 10.0, 5.0, 1.0],
           [1.0, 6.0, 15.0, 20.0, 15.0, 6.0, 1.0]]

_PAD_MODE = {'refl': 'reflect', 'reflect': 'reflect',
             'repl': 'edge', 'replicate': 'edge', 'zero': 'zero'}


def _binomial_1d(filt_size):
    a = np.asarray(_A_LIST[filt_size], dtype=np.float64)
    return (a / a.sum()).astype(np.float32)   # outer(f, f) == filt / filt.sum()


def _fold(idx, size, mode):
    """Map an out-of-range (unpadded) index to its padding source index.
    Mimics ReflectionPad2d / ReplicationPad2d / ZeroPad2d. None => zero pad."""
    if 0 <= idx < size:
        return idx
    if mode == 'zero':
        return None
    if mode == 'edge':
        return min(max(idx, 0), size - 1)
    if size == 1:                               # reflect (no edge repeat)
        return 0
    while idx < 0 or idx >= size:
        if idx < 0:
            idx = -idx
        if idx >= size:
            idx = 2 * (size - 1) - idx
    return idx


def _conv_matrices(filt_size, stride, H, W, Ho, Wo, pad_lo, mode):
    """Banded matrices for the separable strided binomial filter with the
    boundary padding folded back onto interior indices."""
    f = _binomial_1d(filt_size)
    hm_t = np.zeros((Ho, H), dtype=np.float32)     # left-multiply  (Ho, H)
    for o in range(Ho):
        for i in range(filt_size):
            src = _fold(stride * o + i - pad_lo, H, mode)
            if src is not None:
                hm_t[o, src] += f[i]
    wm = np.zeros((W, Wo), dtype=np.float32)       # right-multiply (W, Wo)
    for o in range(Wo):
        for j in range(filt_size):
            src = _fold(stride * o + j - pad_lo, W, mode)
            if src is not None:
                wm[src, o] += f[j]
    return hm_t, wm


def _round_up(x, m):
    return -(-x // m) * m


def _tpu_vmem_bytes():
    try:
        return int(pltpu.get_tpu_info().vmem_capacity_bytes)
    except Exception:
        return 64 * 1024 * 1024            # conservative (v7x-sized) fallback


def _plan(nc, H, W, Ho, Wo, itemsize, store_fused):
    """Pick channels-per-grid-step (a divisor of N*C) and a VMEM limit,
    accounting for lane/sublane padding and the f32 intermediates."""
    vmem = _tpu_vmem_bytes()
    small_vmem = vmem <= 64 * 1024 * 1024          # v7x-class: 64 MiB/TC, 2 TCs
    limit = (40 if small_vmem else 96) * 1024 * 1024
    target_in = (3 if small_vmem else 2) * 1024 * 1024
    margin = 4 * 1024 * 1024
    sub = 8 * max(1, 4 // itemsize)                # sublane pack: f32->8, bf16->16
    csize = 2 if itemsize == 2 else 4

    consts = 2 * (_round_up(W, sub) * _round_up(Wo, 128) * itemsize
                  + _round_up(Ho, 8) * _round_up(H, 128) * csize)

    def in_bytes(c):
        return _round_up(c * H, sub) * _round_up(W, 128) * itemsize

    def block_bytes(c):
        in_b = in_bytes(c)
        if store_fused:
            out_b = _round_up(Ho, sub) * _round_up(c * Wo, 128) * itemsize
            # f32 W-pass result + its lane-fused copy + f32 H-pass result
            inter = (2 * _round_up(c * H, 8) * _round_up(Wo, 128)
                     + _round_up(Ho, 8) * _round_up(c * Wo, 128)) * 4
        else:
            out_b = c * _round_up(Ho, sub) * _round_up(Wo, 128) * itemsize
            # f32 W-pass result + 3D H-pass matrix + f32 H-pass result
            inter = (_round_up(c * H, 8) * _round_up(Wo, 128)
                     + c * _round_up(Ho, 8) * _round_up(H, 128)
                     + c * _round_up(Ho, 8) * _round_up(Wo, 128)) * 4
        return 2 * (in_b + out_b) + inter          # inputs/outputs double-buffered

    divs = [d for d in range(1, nc + 1) if nc % d == 0]
    cands = [d for d in divs if block_bytes(d) + consts + margin <= limit] or [1]

    if store_fused:
        # Bound the per-channel lane-concat unrolling (compile time).
        # TODO(synk): a 2-level (group x channel) grid would lift this cap for
        # tiny planes with a huge channel count.
        cands = [d for d in cands if d <= 128]
        # Lane-dense fused output: prefer cblk*Wo a multiple of 128 if possible.
        lane = [d for d in cands if (d * Wo) % 128 == 0]
        if lane:
            cands = lane

    if small_vmem:
        # v7x megacore: keep >=2 grid steps (ideally an even count) so the
        # "parallel" grid axis shards across both TensorCores.
        even = [d for d in cands if (nc // d) >= 2 and (nc // d) % 2 == 0]
        multi = [d for d in cands if (nc // d) >= 2]
        cands = even or multi or cands
        hit = [d for d in cands if in_bytes(d) >= target_in]
        cblk = hit[0] if hit else cands[-1]
    else:
        # single TensorCore (v5e/v6e, 128 MiB VMEM): fewest, largest steps.
        cblk = cands[-1]

    vmem_limit = limit
    need = block_bytes(cblk) + consts + margin
    if need > vmem_limit:                          # degenerate huge-plane fallback
        vmem_limit = min(int(vmem * 0.9), need)
    return cblk, int(vmem_limit)


def _make_kernel(cblk, H, Ho, Wo, store_fused, compute_dtype):
    if store_fused:
        def kernel(x_ref, wm_ref, hmt_ref, out_ref):
            # x_ref : (1, cblk*H, W)  raw input slab (channels merged host-side)
            # wm_ref: (W, Wo)  W-pass banded matrix, input dtype
            # hmt_ref: (Ho, H) H-pass banded matrix, compute dtype
            # out_ref: (1, Ho, cblk*Wo)  lane-dense fused output
            t = jnp.dot(x_ref[0], wm_ref[...],
                        preferred_element_type=jnp.float32)     # (cblk*H, Wo)
            if cblk == 1:
                t2 = t
            else:
                # Fuse channels onto the lane axis.  A (cblk,H,Wo)->(H,cblk*Wo)
                # sublane->lane merging shape-cast is not reliably lowered by
                # Mosaic when Wo % 128 != 0 (the only case this path handles),
                # so use a single lane-axis concat of per-channel slabs; the
                # slices are tile-aligned whenever H % 8 == 0.
                t2 = jnp.concatenate(
                    [t[c * H:(c + 1) * H, :] for c in range(cblk)], axis=1)
            out = jnp.dot(hmt_ref[...], t2.astype(compute_dtype),
                          preferred_element_type=jnp.float32)   # (Ho, cblk*Wo)
            out_ref[0] = out.astype(out_ref.dtype)
    else:
        def kernel(x_ref, wm_ref, hmt_ref, out_ref):
            # x_ref : (1, cblk*H, W);  wm_ref: (W, Wo)
            # hmt_ref: (cblk, Ho, H)   (host-broadcast, compute dtype)
            # out_ref: (1, cblk, Ho, Wo)  -- Wo already lane-dense, no fusion
            t = jnp.dot(x_ref[0], wm_ref[...],
                        preferred_element_type=jnp.float32)     # (cblk*H, Wo)
            t3 = t.reshape(cblk, H, Wo).astype(compute_dtype)   # tile-aligned (H%8==0)
            out = jnp.einsum('goh,ghw->gow', hmt_ref[...], t3,
                             preferred_element_type=jnp.float32)  # (cblk, Ho, Wo)
            out_ref[0] = out.astype(out_ref.dtype)
    return kernel


def downsample(x, pad_type='reflect', filt_size=3, stride=2, pad_off=0):
    """Equivalent of Downsample(pad_type, filt_size, stride, channels=C)(x)."""
    assert 0 < filt_size < 8
    N, C, H, W = x.shape
    pad_lo = int(1.0 * (filt_size - 1) / 2) + pad_off
    pad_hi = int(np.ceil(1.0 * (filt_size - 1) / 2)) + pad_off
    mode = _PAD_MODE[pad_type]

    Hp, Wp = H + pad_lo + pad_hi, W + pad_lo + pad_hi
    Ho = (Hp - filt_size) // stride + 1
    Wo = (Wp - filt_size) // stride + 1

    # TODO(synk): for very large W/H the dense banded matrices do O(W/filt)
    # extra MACs (and get big); band-tile the two passes over 128-wide output
    # chunks to keep v5e's weak MXU off the critical path.
    hm_t_np, wm_np = _conv_matrices(filt_size, stride, H, W, Ho, Wo, pad_lo, mode)

    # bf16 inputs: run both MXU passes in bf16 (binomial/2^k weights and their
    # folded boundary sums are exact in bf16); accumulate in f32 either way.
    compute_dtype = jnp.bfloat16 if x.dtype == jnp.bfloat16 else jnp.float32
    wm = jnp.asarray(wm_np).astype(x.dtype)

    NC = N * C
    itemsize = np.dtype(x.dtype).itemsize

    # Lane-fused output only pays when Wo is narrow; for wide outputs store
    # (cblk, Ho, Wo) directly and skip the wrapper un-fuse HBM round trip.
    store_fused = not ((Wo % 128 == 0 or Wo >= 512) and H % 8 == 0)

    cblk, vmem_limit = _plan(NC, H, W, Ho, Wo, itemsize, store_fused)
    G = NC // cblk
    # TODO(synk): if N*C is prime/awkward, cblk can degrade to 1; a cdiv grid
    # with a masked tail block would avoid that without padding the input.

    xr = x.reshape(G, cblk * H, W)                 # metadata-only reshape

    if store_fused:
        hm_t = jnp.asarray(hm_t_np).astype(compute_dtype)            # (Ho, H)
        hmt_spec = pl.BlockSpec((Ho, H), lambda g: (0, 0))
        out_shape = jax.ShapeDtypeStruct((G, Ho, cblk * Wo), x.dtype)
        out_spec = pl.BlockSpec((1, Ho, cblk * Wo), lambda g: (g, 0, 0))
    else:
        hm_t = jnp.asarray(np.ascontiguousarray(
            np.broadcast_to(hm_t_np, (cblk, Ho, H)))).astype(compute_dtype)
        hmt_spec = pl.BlockSpec((cblk, Ho, H), lambda g: (0, 0, 0))
        out_shape = jax.ShapeDtypeStruct((G, cblk, Ho, Wo), x.dtype)
        out_spec = pl.BlockSpec((1, cblk, Ho, Wo), lambda g: (g, 0, 0, 0))

    flops = 2 * NC * Wo * (H * W + Ho * H)
    bytes_accessed = (NC * H * W + NC * Ho * Wo) * itemsize \
        + int(hm_t.size) * np.dtype(compute_dtype).itemsize + wm_np.size * itemsize
    cost = pl.CostEstimate(flops=int(flops), transcendentals=0,
                           bytes_accessed=int(bytes_accessed))

    kernel = _make_kernel(cblk, H, Ho, Wo, store_fused, compute_dtype)

    out_raw = pl.pallas_call(
        kernel,
        out_shape=out_shape,
        grid=(G,),
        in_specs=[
            pl.BlockSpec((1, cblk * H, W), lambda g: (g, 0, 0)),
            pl.BlockSpec((W, Wo), lambda g: (0, 0)),
            hmt_spec,
        ],
        out_specs=out_spec,
        compiler_params=pltpu.CompilerParams(
            dimension_semantics=("parallel",),
            vmem_limit_bytes=vmem_limit),
        cost_estimate=cost,
    )(xr, wm, hm_t)

    if store_fused:
        # Un-fuse channels from lanes on the (4x smaller) output.
        out = (out_raw.reshape(G, Ho, cblk, Wo)
                      .transpose(0, 2, 1, 3)
                      .reshape(N, C, Ho, Wo))
    else:
        out = out_raw.reshape(N, C, Ho, Wo)        # metadata-only
    return out


def _reference(x, pad_type='reflect', filt_size=3, stride=2, pad_off=0):
    """Pure-JAX reference (pad + depthwise conv) for correctness checks."""
    N, C, H, W = x.shape
    pad_lo = int(1.0 * (filt_size - 1) / 2) + pad_off
    pad_hi = int(np.ceil(1.0 * (filt_size - 1) / 2)) + pad_off
    jmode = {'reflect': 'reflect', 'edge': 'edge', 'zero': 'constant'}[_PAD_MODE[pad_type]]
    if pad_lo == 0 and pad_hi == 0:
        xpad = x
    else:
        xpad = jnp.pad(x, ((0, 0), (0, 0), (pad_lo, pad_hi), (pad_lo, pad_hi)),
                       mode=jmode)
    f1 = _binomial_1d(filt_size)
    filt2d = np.outer(f1, f1).astype(np.float32)
    w = jnp.broadcast_to(jnp.asarray(filt2d)[None, None],
                         (C, 1, filt_size, filt_size))
    return jax.lax.conv_general_dilated(
        xpad, w, window_strides=(stride, stride), padding='VALID',
        feature_group_count=C,
        dimension_numbers=('NCHW', 'OIHW', 'NCHW'))


if __name__ == "__main__":
    key = jax.random.PRNGKey(0)
    x = jax.random.normal(key, (2, 4, 16, 16), dtype=jnp.float32)

    # Default config (matches the PyTorch module defaults): reflect, filt 3, stride 2.
    out = jax.block_until_ready(downsample(x))
    ref = jax.block_until_ready(_reference(x))
    assert out.shape == (2, 4, 8, 8), out.shape
    np.testing.assert_allclose(np.asarray(out), np.asarray(ref),
                               rtol=1e-5, atol=1e-5)

    # Wider/even filters and the other padding modes (folded-padding matrices).
    for pt, fs in (('reflect', 5), ('replicate', 4), ('zero', 3)):
        o = jax.block_until_ready(downsample(x, pad_type=pt, filt_size=fs))
        r = jax.block_until_ready(_reference(x, pad_type=pt, filt_size=fs))
        np.testing.assert_allclose(np.asarray(o), np.asarray(r),
                                   rtol=1e-5, atol=1e-5)

    # filt_size=1 degenerates to strided slicing.
    o1 = jax.block_until_ready(downsample(x, filt_size=1))
    np.testing.assert_allclose(np.asarray(o1), np.asarray(x[:, :, ::2, ::2]),
                               rtol=1e-6, atol=1e-6)

    # bf16 path (both MXU passes in bf16, f32 accumulation).
    xb = x.astype(jnp.bfloat16)
    ob = jax.block_until_ready(downsample(xb))
    rb = jax.block_until_ready(_reference(xb.astype(jnp.float32)))
    np.testing.assert_allclose(np.asarray(ob).astype(np.float32), np.asarray(rb),
                               rtol=3e-2, atol=3e-2)

    # Wide image: exercises the direct (un-fused, lane-dense Wo=128) store path.
    xw = jax.random.normal(jax.random.PRNGKey(1), (1, 2, 16, 256),
                           dtype=jnp.float32)
    ow = jax.block_until_ready(downsample(xw))
    rw = jax.block_until_ready(_reference(xw))
    assert ow.shape == (1, 2, 8, 128), ow.shape
    np.testing.assert_allclose(np.asarray(ow), np.asarray(rw),
                               rtol=1e-5, atol=1e-5)

    print("KERNEL_OK")
</pallas_src>

<mosaic_0001>
module attributes {stable_mosaic.version = 11 : i64} {
  func.func @kernel(%arg0: i32, %arg1: memref<1x64x16xf32, #tpu.memory_space<vmem>>, %arg2: memref<16x8xf32, #tpu.memory_space<vmem>>, %arg3: memref<8x16xf32, #tpu.memory_space<vmem>>, %arg4: memref<1x8x32xf32, #tpu.memory_space<vmem>>) attributes {dimension_semantics = [#tpu.dimension_semantics<parallel>], iteration_bounds = array<i64: 2>, scalar_prefetch = 0 : i64, scratch_operands = 0 : i64, tpu.core_type = #tpu.core_type<tc>, window_params = [{transform_indices = @transform_0, window_bounds = array<i64: 1, 64, 16>}, {pipeline_mode = #tpu.pipeline_mode<synchronous>, transform_indices = @transform_1, window_bounds = array<i64: 16, 8>}, {pipeline_mode = #tpu.pipeline_mode<synchronous>, transform_indices = @transform_2, window_bounds = array<i64: 8, 16>}, {transform_indices = @transform_3, window_bounds = array<i64: 1, 8, 32>}]} {
    %c0 = arith.constant 0 : index
    %c0_0 = arith.constant 0 : index
    %c0_1 = arith.constant 0 : index
    %0 = vector.load %arg1[%c0, %c0_0, %c0_1] : memref<1x64x16xf32, #tpu.memory_space<vmem>>, vector<1x64x16xf32>
    %1 = vector.shape_cast %0 : vector<1x64x16xf32> to vector<64x16xf32>
    %c0_2 = arith.constant 0 : index
    %c0_3 = arith.constant 0 : index
    %2 = vector.load %arg2[%c0_2, %c0_3] : memref<16x8xf32, #tpu.memory_space<vmem>>, vector<16x8xf32>
    %cst = arith.constant dense<0.000000e+00> : vector<64x8xf32>
    %3 = tpu.matmul %1, %2, %cst {dimension_numbers = #tpu.dot_dimension_numbers<[1], [0], [0], [1], [0, 0, 1, 1], [], []>} : vector<64x16xf32>, vector<16x8xf32>, vector<64x8xf32> -> vector<64x8xf32>
    %4 = vector.extract_strided_slice %3 {offsets = [0, 0], sizes = [16, 8], strides = [1, 1]} : vector<64x8xf32> to vector<16x8xf32>
    %5 = vector.extract_strided_slice %3 {offsets = [16, 0], sizes = [16, 8], strides = [1, 1]} : vector<64x8xf32> to vector<16x8xf32>
    %6 = vector.extract_strided_slice %3 {offsets = [32, 0], sizes = [16, 8], strides = [1, 1]} : vector<64x8xf32> to vector<16x8xf32>
    %7 = vector.extract_strided_slice %3 {offsets = [48, 0], sizes = [16, 8], strides = [1, 1]} : vector<64x8xf32> to vector<16x8xf32>
    %8 = tpu.concatenate %4, %5, %6, %7 in 1 : vector<16x8xf32>, vector<16x8xf32>, vector<16x8xf32>, vector<16x8xf32> -> vector<16x32xf32>
    %c0_4 = arith.constant 0 : index
    %c0_5 = arith.constant 0 : index
    %9 = vector.load %arg3[%c0_4, %c0_5] : memref<8x16xf32, #tpu.memory_space<vmem>>, vector<8x16xf32>
    %cst_6 = arith.constant dense<0.000000e+00> : vector<8x32xf32>
    %10 = tpu.matmul %9, %8, %cst_6 {dimension_numbers = #tpu.dot_dimension_numbers<[1], [0], [0], [1], [0, 0, 1, 1], [], []>} : vector<8x16xf32>, vector<16x32xf32>, vector<8x32xf32> -> vector<8x32xf32>
    %c0_7 = arith.constant 0 : index
    %c0_8 = arith.constant 0 : index
    %c0_9 = arith.constant 0 : index
    %11 = vector.load %arg4[%c0_7, %c0_8, %c0_9] : memref<1x8x32xf32, #tpu.memory_space<vmem>>, vector<1x8x32xf32>
    %12 = vector.shape_cast %11 : vector<1x8x32xf32> to vector<8x32xf32>
    %13 = vector.shape_cast %10 : vector<8x32xf32> to vector<1x8x32xf32>
    tpu.vector_store %arg4[%c0_7, %c0_8, %c0_9], %13 {strides = array<i32>} : memref<1x8x32xf32, #tpu.memory_space<vmem>>, vector<1x8x32xf32>,
    return
  }
  func.func @transform_0(%arg0: i32) -> (i32, i32, i32) {
    %c0_i32 = arith.constant 0 : i32
    %c0_i32_0 = arith.constant 0 : i32
    %c0_i32_1 = arith.constant 0 : i32
    return %arg0, %c0_i32, %c0_i32_0 : i32, i32, i32
  }
  func.func @transform_1(%arg0: i32) -> (i32, i32) {
    %c0_i32 = arith.constant 0 : i32
    %c0_i32_0 = arith.constant 0 : i32
    %c0_i32_1 = arith.constant 0 : i32
    return %c0_i32, %c0_i32_0 : i32, i32
  }
  func.func @transform_2(%arg0: i32) -> (i32, i32) {
    %c0_i32 = arith.constant 0 : i32
    %c0_i32_0 = arith.constant 0 : i32
    %c0_i32_1 = arith.constant 0 : i32
    return %c0_i32, %c0_i32_0 : i32, i32
  }
  func.func @transform_3(%arg0: i32) -> (i32, i32, i32) {
    %c0_i32 = arith.constant 0 : i32
    %c0_i32_0 = arith.constant 0 : i32
    %c0_i32_1 = arith.constant 0 : i32
    return %arg0, %c0_i32, %c0_i32_0 : i32, i32, i32
  }
}

</mosaic_0001>

<llo_original>
// kernel: tpu_custom_call.1
$region0: #{tpu_custom_call.1}
  #allocation0 [shape = 'u32[]', space=smem, size = 0x4, offset = 0x4, fixed_abs, tag = 'smem constant byte address 0x4 - core index']
  #allocation1 [shape = 'u32[144,128]{1,0:T(1,128)}', space=vmem, size = 0x12000, scoped, tag = 'internal scratch']
  %s0 = inlined_call_operand.vmem [shape: f32[2,64,16], index: 0, kind: input, shape index: {}]
  %s1 = inlined_call_operand.vmem [shape: f32[16,8], index: 1, kind: input, shape index: {}]
  %s2 = inlined_call_operand.vmem [shape: f32[8,16], index: 2, kind: input, shape index: {}]
  %s3 = inlined_call_operand.hbm [shape: f32[2,8,32], index: 3, kind: output, shape index: {}]
  %s4 = sld [smem:[#allocation0]]
  $region45: #{tpu_custom_call.1} parent=0
    _
  %s6 = ssub.s32 1, %s4
  %s7 = scalar_select 0, %s6, %s4
  $region1: #{tpu_custom_call.1} parent=0
    #allocation2 [shape = 'u8[8192]{0}', space=vmem, size = 0x2000, scoped, tag = 'output window, operand 0']
    #allocation3 [shape = 's32[2]{0}', space=sflag, size = 0x8, scoped, tag = 'scoped memory for tpu_custom_call.1']
    %8 = vsyncpa [#allocation3], 0
    %s9 = scalar_lea.sflag [#allocation3], 1
    %10 = vsyncpa %s9, 0
    loop: start=0, step=1, limit=4
    $region2: #{tpu_custom_call.1} parent=1 // loop_pre_header
      _
    $region3: #{tpu_custom_call.1} parent=1 // loop_header
      %s12 = sphi 0, %s16
      %p13 = scmp.ge.s32.totalorder %s12, 4
      %s22 = sphi 0, %s24
      %s25 = sphi 0, %s22
      %s26 = sphi 0, %s25
      %s42 = sphi 0, %s26
      %s46 = sphi 0, %s46
      %s48 = sphi 0, %s46
      %s49 = sphi 0, %s48
      %s63 = sphi 0, %s49
      %s67 = sphi 0, %s67
      %s69 = sphi 0, %s67
      %s70 = sphi 0, %s69
      %s84 = sphi 0, %s70
      %s90 = sphi 0, %s92
      %s93 = sphi 0, %s90
      %s94 = sphi 0, %s93
      %s110 = sphi 0, %s94
    $region4: #{tpu_custom_call.1} parent=1 // loop_header_branch
      %15 = sbr.rel (%p13) target = $region8
    $region5: #{tpu_custom_call.1} parent=1 // loop_body
      %s17 = ssub.s32 %s12, 1
      %s18 = ssub.s32 %s12, 2
      %s19 = sadd.s32 %s12, 1
      %s20 = ssub.s32 %s12, %s19
      %p21 = scmp.eq.s32.totalorder %s20, 0
      %s23 = sadd.s32 %s22, 1
      %s24 = scalar_select %p21, %s22, %s23
      %p27 = pneg %p21
      %p28 = scmp.eq.s32.totalorder %s12, 1
      %p29 = por %p27, %p28
      %p30 = scmp.ne.s32.totalorder %s22, %s25
      %p31 = scmp.eq.s32.totalorder %s12, 0
      %p32 = por %p30, %p31
      %p33 = scmp.ne.s32.totalorder %s22, %s25
      %p34 = scmp.eq.s32.totalorder %s17, 1
      %p35 = por %p33, %p34
      %p36 = scmp.ne.s32.totalorder %s25, %s26
      %p37 = scmp.eq.s32.totalorder %s17, 0
      %p38 = por %p36, %p37
      %p39 = scmp.ne.s32.totalorder %s25, %s26
      %p40 = scmp.eq.s32.totalorder %s18, 1
      %p41 = por %p39, %p40
      %p43 = scmp.ne.s32.totalorder %s26, %s42
      %p44 = scmp.eq.s32.totalorder %s18, 0
      %p45 = por %p43, %p44
      %s47 = sadd.s32 %s46, 1
      %p50 = scmp.eq.s32.totalorder %s12, 1
      %p51 = scmp.ne.s32.totalorder %s46, %s48
      %p52 = scmp.eq.s32.totalorder %s12, 0
      %p53 = por %p51, %p52
      %p54 = scmp.ne.s32.totalorder %s46, %s48
      %p55 = scmp.eq.s32.totalorder %s17, 1
      %p56 = por %p54, %p55
      %p57 = scmp.ne.s32.totalorder %s48, %s49
      %p58 = scmp.eq.s32.totalorder %s17, 0
      %p59 = por %p57, %p58
      %p60 = scmp.ne.s32.totalorder %s48, %s49
      %p61 = scmp.eq.s32.totalorder %s18, 1
      %p62 = por %p60, %p61
      %p64 = scmp.ne.s32.totalorder %s49, %s63
      %p65 = scmp.eq.s32.totalorder %s18, 0
      %p66 = por %p64, %p65
      %s68 = sadd.s32 %s67, 1
      %p71 = scmp.eq.s32.totalorder %s12, 1
      %p72 = scmp.ne.s32.totalorder %s67, %s69
      %p73 = scmp.eq.s32.totalorder %s12, 0
      %p74 = por %p72, %p73
      %p75 = scmp.ne.s32.totalorder %s67, %s69
      %p76 = scmp.eq.s32.totalorder %s17, 1
      %p77 = por %p75, %p76
      %p78 = scmp.ne.s32.totalorder %s69, %s70
      %p79 = scmp.eq.s32.totalorder %s17, 0
      %p80 = por %p78, %p79
      %p81 = scmp.ne.s32.totalorder %s69, %s70
      %p82 = scmp.eq.s32.totalorder %s18, 1
      %p83 = por %p81, %p82
      %p85 = scmp.ne.s32.totalorder %s70, %s84
      %p86 = scmp.eq.s32.totalorder %s18, 0
      %p87 = por %p85, %p86
      %s88 = ssub.s32 %s12, %s19
      %p89 = scmp.eq.s32.totalorder %s88, 0
      %s91 = sadd.s32 %s90, 1
      %s92 = scalar_select %p89, %s90, %s91
      %p95 = pneg %p89
      %p96 = scmp.eq.s32.totalorder %s12, 1
      %p97 = por %p95, %p96
      %p98 = scmp.ne.s32.totalorder %s90, %s93
      %p99 = scmp.eq.s32.totalorder %s12, 0
      %p100 = por %p98, %p99
      %p101 = scmp.ne.s32.totalorder %s90, %s93
      %p102 = scmp.eq.s32.totalorder %s17, 1
      %p103 = por %p101, %p102
      %p104 = scmp.ne.s32.totalorder %s93, %s94
      %p105 = scmp.eq.s32.totalorder %s17, 0
      %p106 = por %p104, %p105
      %p107 = scmp.ne.s32.totalorder %s93, %s94
      %p108 = scmp.eq.s32.totalorder %s18, 1
      %p109 = por %p107, %p108
      %p111 = scmp.ne.s32.totalorder %s94, %s110
      %p112 = scmp.eq.s32.totalorder %s18, 0
      %p113 = por %p111, %p112
      %p114 = scmp.le.s32.totalorder 1, %s12
      %p115 = scmp.lt.s32.totalorder %s12, 3
      %p116 = pnand %p114, %p115
      %p117 = pneg %p116
      // Predicated region
      $region9: #{tpu_custom_call.1} parent=5 // pred_check
        _
      $region10: #{tpu_custom_call.1} parent=5 // pred_check_branch
        %119 = sbr.rel (%p116) target = $region12
      $region11: #{tpu_custom_call.1} parent=5 // pred_region
        %s120 = ssub.s32 %s12, 1
        // Predicated region
        $region13: #{tpu_custom_call.1} parent=11 // pred_check
          %p121 = pneg %p59
        $region14: #{tpu_custom_call.1} parent=11 // pred_check_branch
          %123 = sbr.rel (%p121) target = $region16
        $region15: #{tpu_custom_call.1} parent=11 // pred_region
          _
        $region16: #{tpu_custom_call.1} parent=11 // pred_fallthru
          _
        // Predicated region
        $region17: #{tpu_custom_call.1} parent=11 // pred_check
          %p124 = pneg %p80
        $region18: #{tpu_custom_call.1} parent=11 // pred_check_branch
          %126 = sbr.rel (%p124) target = $region20
        $region19: #{tpu_custom_call.1} parent=11 // pred_region
          _
        $region20: #{tpu_custom_call.1} parent=11 // pred_fallthru
          _
      $region12: #{tpu_custom_call.1} parent=5 // pred_fallthru
        _
      %p127 = scmp.lt.s32.totalorder %s12, 2
      // Predicated region
      $region21: #{tpu_custom_call.1} parent=5 // pred_check
        %p128 = pneg %p127
      $region22: #{tpu_custom_call.1} parent=5 // pred_check_branch
        %130 = sbr.rel (%p128) target = $region24
      $region23: #{tpu_custom_call.1} parent=5 // pred_region
        // Predicated region
        $region25: #{tpu_custom_call.1} parent=23 // pred_check
          %p131 = pneg %p32
        $region26: #{tpu_custom_call.1} parent=23 // pred_check_branch
          %133 = sbr.rel (%p131) target = $region28
        $region27: #{tpu_custom_call.1} parent=23 // pred_region
          %p134 = scmp.lt.s32.totalorder %s12, 1
          %s135 = scalar_select %p134, %s12, 1
          %s136 = smul.addr %s135, 8
          %s137 = smul.addr %s136, 8
          %s138 = scalar_lea.vmem %s0, %s137
        $region28: #{tpu_custom_call.1} parent=23 // pred_fallthru
          _
      $region24: #{tpu_custom_call.1} parent=5 // pred_fallthru
        _
      %p139 = scmp.le.s32.totalorder 1, %s12
      %p140 = scmp.lt.s32.totalorder %s12, 3
      %p141 = pnand %p139, %p140
      %p142 = pneg %p141
      // Predicated region
      $region29: #{tpu_custom_call.1} parent=5 // pred_check
        _
      $region30: #{tpu_custom_call.1} parent=5 // pred_check_branch
        %144 = sbr.rel (%p141) target = $region32
      $region31: #{tpu_custom_call.1} parent=5 // pred_region
        %s145 = ssub.s32 %s12, 1
        %p146 = scmp.lt.s32.totalorder %s17, 1
        %s147 = scalar_select %p146, %s17, 1
        %s148 = smul.addr %s147, 8
        %s149 = smul.addr %s148, 8
        %s150 = scalar_lea.vmem %s0, %s149
        %p151 = pneg %p38
        %p152 = pneg %p35
        %p153 = pneg %p59
        %p154 = pneg %p56
        %p155 = pneg %p80
        %p156 = pneg %p77
        %p157 = pneg %p106
        %p158 = pneg %p103
        %s159 = sand.u32 %s93, 1
        %s160 = scalar_lea.sflag [#allocation3], %s159
        %s161 = sand.u32 %s93, 1
        %s162 = smul.addr %s161, 8
        %s163 = scalar_lea.vmem [#allocation2], %s162
        %p164 = scmp.lt.s32.totalorder %s17, 1
        %s165 = scalar_select %p164, %s17, 1
        %s166 = smul.addr %s165, 8
        %s167 = smul.addr %s166, 8
        %s168 = scalar_lea.vmem %s0, %s167
        %v169 = vld [vmem:[%s168] sm:$0xff]
        %v170 = vld [vmem:[%s168 + $0x8] sm:$0xff]
        %v171 = vld [vmem:[%s168 + $0x10] sm:$0xff]
        %v172 = vld [vmem:[%s168 + $0x18] sm:$0xff]
        %v173 = vld [vmem:[%s168 + $0x20] sm:$0xff]
        %v174 = vld [vmem:[%s168 + $0x28] sm:$0xff]
        %v175 = vld [vmem:[%s168 + $0x30] sm:$0xff]
        %v176 = vld [vmem:[%s168 + $0x38] sm:$0xff]
        %v177 = vld [vmem:[%s1] sm:$0xff]
        %v178 = vld [vmem:[%s1 + $0x8] sm:$0xff]
        %vm179 = vcmask 130048
        %v181 = vsel %vm179, %v169, 0
        %v184 = vsel %vm179, %v170, 0
        %v187 = vsel %vm179, %v171, 0
        %v190 = vsel %vm179, %v172, 0
        %v193 = vsel %vm179, %v173, 0
        %v196 = vsel %vm179, %v174, 0
        %v199 = vsel %vm179, %v175, 0
        %v202 = vsel %vm179, %v176, 0
        %204 = vmatprep.subr.mxu0 0.0
        %205 = vmatpush1.msra.mxu0 %v177
        %206 = vmatprep.subr.mxu0 0.0
        %207 = vmatpush1.msra.mxu0 %v178
        %208 = vmatprep.subr.mxu0 0.0
        %209 = vmatpush1.msra.mxu0 0.0
        %210 = vmatprep.subr.mxu0 0.0
        %211 = vmatpush1.msra.mxu0 0.0
        %212 = vmatprep.subr.mxu0 0.0
        %213 = vmatpush1.msra.mxu0 0.0
        %214 = vmatprep.subr.mxu0 0.0
        %215 = vmatpush1.msra.mxu0 0.0
        %216 = vmatprep.subr.mxu0 0.0
        %217 = vmatpush1.msra.mxu0 0.0
        %218 = vmatprep.subr.mxu0 0.0
        %219 = vmatpush1.msra.mxu0 0.0
        %220 = vmatprep.subr.mxu0 0.0
        %221 = vmatpush1.msra.mxu0 0.0
        %222 = vmatprep.subr.mxu0 0.0
        %223 = vmatpush1.msra.mxu0 0.0
        %224 = vmatprep.subr.mxu0 0.0
        %225 = vmatpush1.msra.mxu0 0.0
        %226 = vmatprep.subr.mxu0 0.0
        %227 = vmatpush1.msra.mxu0 0.0
        %228 = vmatprep.subr.mxu0 0.0
        %229 = vmatpush1.msra.mxu0 0.0
        %230 = vmatprep.subr.mxu0 0.0
        %231 = vmatpush1.msra.mxu0 0.0
        %232 = vmatprep.subr.mxu0 0.0
        %233 = vmatpush1.msra.mxu0 0.0
        %234 = vmatprep.subr.mxu0 0.0
        %235 = vmatpush1.msra.mxu0 0.0
        %236 = vmatprep.subr.mxu0 0.0
        %237 = vmatpush1.msra.mxu0 0.0
        %238 = vmatprep.subr.mxu0 0.0
        %239 = vmatpush1.msra.mxu0 0.0
        %240 = vmatprep.subr.mxu0 0.0
        %241 = vmatpush1.msra.mxu0 0.0
        %242 = vmatprep.subr.mxu0 0.0
        %243 = vmatpush1.msra.mxu0 0.0
        %244 = vmatprep.subr.mxu0 0.0
        %245 = vmatpush1.msra.mxu0 0.0
        %246 = vmatprep.subr.mxu0 0.0
        %247 = vmatpush1.msra.mxu0 0.0
        %248 = vmatprep.subr.mxu0 0.0
        %249 = vmatpush1.msra.mxu0 0.0
        %250 = vmatprep.subr.mxu0 0.0
        %251 = vmatpush1.msra.mxu0 0.0
        %252 = vmatprep.subr.mxu0 0.0
        %253 = vmatpush1.msra.mxu0 0.0
        %254 = vmatprep.subr.mxu0 0.0
        %255 = vmatpush1.msra.mxu0 0.0
        %256 = vmatprep.subr.mxu0 0.0
        %257 = vmatpush1.msra.mxu0 0.0
        %258 = vmatprep.subr.mxu0 0.0
        %259 = vmatpush1.msra.mxu0 0.0
        %260 = vmatprep.subr.mxu0 0.0
        %261 = vmatpush1.msra.mxu0 0.0
        %262 = vmatprep.subr.mxu0 0.0
        %263 = vmatpush1.msra.mxu0 0.0
        %264 = vmatprep.subr.mxu0 0.0
        %265 = vmatpush1.msra.mxu0 0.0
        %266 = vmatprep.subr.mxu0 0.0
        %267 = vmatpush1.msra.mxu0 0.0
        %268 = vmatprep.mubr.f32.mxu0 0.0
        %269 = vmatmul.mubr.f32.gmra.mrb[0].mxu0 %v181
        %v270 = vpop.f32.mrb[0].mxu0
        %v271 = vadd.f32 0.0, %v270
        %v272 = vpop.f32.mrb[0].mxu0
        %273 = vmatprep.mubr.f32.mxu0 0.0
        %274 = vmatmul.mubr.f32.gmra.mrb[0].mxu0 %v184
        %v275 = vpop.f32.mrb[0].mxu0
        %v276 = vadd.f32 0.0, %v275
        %v277 = vpop.f32.mrb[0].mxu0
        %278 = vmatprep.mubr.f32.mxu0 0.0
        %279 = vmatmul.mubr.f32.gmra.mrb[0].mxu0 %v187
        %v280 = vpop.f32.mrb[0].mxu0
        %v281 = vadd.f32 0.0, %v280
        %v282 = vpop.f32.mrb[0].mxu0
        %283 = vmatprep.mubr.f32.mxu0 0.0
        %284 = vmatmul.mubr.f32.gmra.mrb[0].mxu0 %v190
        %v285 = vpop.f32.mrb[0].mxu0
        %v286 = vadd.f32 0.0, %v285
        %v287 = vpop.f32.mrb[0].mxu0
        %288 = vmatprep.mubr.f32.mxu0 0.0
        %289 = vmatmul.mubr.f32.gmra.mrb[0].mxu0 %v193
        %v290 = vpop.f32.mrb[0].mxu0
        %v291 = vadd.f32 0.0, %v290
        %v292 = vpop.f32.mrb[0].mxu0
        %293 = vmatprep.mubr.f32.mxu0 0.0
        %294 = vmatmul.mubr.f32.gmra.mrb[0].mxu0 %v196
        %v295 = vpop.f32.mrb[0].mxu0
        %v296 = vadd.f32 0.0, %v295
        %v297 = vpop.f32.mrb[0].mxu0
        %298 = vmatprep.mubr.f32.mxu0 0.0
        %299 = vmatmul.mubr.f32.gmra.mrb[0].mxu0 %v199
        %v300 = vpop.f32.mrb[0].mxu0
        %v301 = vadd.f32 0.0, %v300
        %v302 = vpop.f32.mrb[0].mxu0
        %303 = vmatprep.mubr.f32.mxu0 0.0
        %304 = vmatmul.mubr.f32.gmra.mrb[0].mxu0 %v202
        %v305 = vpop.f32.mrb[0].mxu0
        %v306 = vadd.f32 0.0, %v305
        %v307 = vpop.f32.mrb[0].mxu0
        %308 = vdwg.mxu0
        %311 = vrot.lane.b32.xlu0 %v281, 8
        %v312 = vpop.permute.xlu0 %311
        %313 = vrot.lane.b32.xlu0 %v286, 8
        %v314 = vpop.permute.xlu0 %313
        %319 = vrot.lane.b32.xlu0 %v291, 16
        %v320 = vpop.permute.xlu0 %319
        %321 = vrot.lane.b32.xlu0 %v296, 16
        %v322 = vpop.permute.xlu0 %321
        %327 = vrot.lane.b32.xlu0 %v301, 24
        %v328 = vpop.permute.xlu0 %327
        %329 = vrot.lane.b32.xlu0 %v306, 24
        %v330 = vpop.permute.xlu0 %329
        %vm333 = vcmask 64512
        %v334 = vsel %vm333, %v271, %v312
        %v335 = vsel %vm333, %v276, %v314
        %v336 = vsel %vm179, %v334, %v320
        %v337 = vsel %vm179, %v335, %v322
        %vm338 = vcmask 195584
        %v339 = vsel %vm338, %v336, %v328
        %v340 = vsel %vm338, %v337, %v330
        %v341 = vld [vmem:[%s2] sm:$0xff]
        %v343 = vsel %vm179, %v341, 0
        %345 = vmatprep.subr.mxu0 0.0
        %346 = vmatpush1.msra.mxu0 %v339
        %347 = vmatprep.subr.mxu0 0.0
        %348 = vmatpush1.msra.mxu0 %v340
        %349 = vmatprep.subr.mxu0 0.0
        %350 = vmatpush1.msra.mxu0 0.0
        %351 = vmatprep.subr.mxu0 0.0
        %352 = vmatpush1.msra.mxu0 0.0
        %353 = vmatprep.subr.mxu0 0.0
        %354 = vmatpush1.msra.mxu0 0.0
        %355 = vmatprep.subr.mxu0 0.0
        %356 = vmatpush1.msra.mxu0 0.0
        %357 = vmatprep.subr.mxu0 0.0
        %358 = vmatpush1.msra.mxu0 0.0
        %359 = vmatprep.subr.mxu0 0.0
        %360 = vmatpush1.msra.mxu0 0.0
        %361 = vmatprep.subr.mxu0 0.0
        %362 = vmatpush1.msra.mxu0 0.0
        %363 = vmatprep.subr.mxu0 0.0
        %364 = vmatpush1.msra.mxu0 0.0
        %365 = vmatprep.subr.mxu0 0.0
        %366 = vmatpush1.msra.mxu0 0.0
        %367 = vmatprep.subr.mxu0 0.0
        %368 = vmatpush1.msra.mxu0 0.0
        %369 = vmatprep.subr.mxu0 0.0
        %370 = vmatpush1.msra.mxu0 0.0
        %371 = vmatprep.subr.mxu0 0.0
        %372 = vmatpush1.msra.mxu0 0.0
        %373 = vmatprep.subr.mxu0 0.0
        %374 = vmatpush1.msra.mxu0 0.0
        %375 = vmatprep.subr.mxu0 0.0
        %376 = vmatpush1.msra.mxu0 0.0
        %377 = vmatprep.subr.mxu0 0.0
        %378 = vmatpush1.msra.mxu0 0.0
        %379 = vmatprep.subr.mxu0 0.0
        %380 = vmatpush1.msra.mxu0 0.0
        %381 = vmatprep.subr.mxu0 0.0
        %382 = vmatpush1.msra.mxu0 0.0
        %383 = vmatprep.subr.mxu0 0.0
        %384 = vmatpush1.msra.mxu0 0.0
        %385 = vmatprep.subr.mxu0 0.0
        %386 = vmatpush1.msra.mxu0 0.0
        %387 = vmatprep.subr.mxu0 0.0
        %388 = vmatpush1.msra.mxu0 0.0
        %389 = vmatprep.subr.mxu0 0.0
        %390 = vmatpush1.msra.mxu0 0.0
        %391 = vmatprep.subr.mxu0 0.0
        %392 = vmatpush1.msra.mxu0 0.0
        %393 = vmatprep.subr.mxu0 0.0
        %394 = vmatpush1.msra.mxu0 0.0
        %395 = vmatprep.subr.mxu0 0.0
        %396 = vmatpush1.msra.mxu0 0.0
        %397 = vmatprep.subr.mxu0 0.0
        %398 = vmatpush1.msra.mxu0 0.0
        %399 = vmatprep.subr.mxu0 0.0
        %400 = vmatpush1.msra.mxu0 0.0
        %401 = vmatprep.subr.mxu0 0.0
        %402 = vmatpush1.msra.mxu0 0.0
        %403 = vmatprep.subr.mxu0 0.0
        %404 = vmatpush1.msra.mxu0 0.0
        %405 = vmatprep.subr.mxu0 0.0
        %406 = vmatpush1.msra.mxu0 0.0
        %407 = vmatprep.subr.mxu0 0.0
        %408 = vmatpush1.msra.mxu0 0.0
        %409 = vmatprep.mubr.f32.mxu0 0.0
        %410 = vmatmul.mubr.f32.gmra.mrb[0].mxu0 %v343
        %v411 = vpop.f32.mrb[0].mxu0
        %v412 = vadd.f32 0.0, %v411
        %v413 = vpop.f32.mrb[0].mxu0
        %414 = vdwg.mxu0
        %vm415 = vcmask 261120
        %416 = vst.msk [vmem:[%s163] sm:$0xff] %vm415, %v412
        %s417 = sand.u32 %s93, 1
        %s418 = scalar_lea.sflag [#allocation3], %s417
        %s419 = sand.u32 %s93, 1
        %s420 = smul.addr %s419, 8
        %s421 = scalar_lea.vmem [#allocation2], %s420
        // Predicated region
        $region33: #{tpu_custom_call.1} parent=31 // pred_check
          %p422 = pneg %p103
        $region34: #{tpu_custom_call.1} parent=31 // pred_check_branch
          %424 = sbr.rel (%p422) target = $region36
        $region35: #{tpu_custom_call.1} parent=31 // pred_region
          %s426 = ssub.s32 128, 128
          %427 = vsyncadd %s418, %s426
          %s428 = smul.addr %s17, 128
          %s429 = scalar_lea.hbm %s3, %s428
          %s431 = sshll.u32 %s421, 4
          %s432 = int_to_ptr.vmem [resolvable:$true] %s431
          %434 = dma.vmem_to_hbm [thread:$0]  %s432, 128, %s429, %s418
        $region36: #{tpu_custom_call.1} parent=31 // pred_fallthru
          _
      $region32: #{tpu_custom_call.1} parent=5 // pred_fallthru
        _
      %p435 = scmp.le.s32.totalorder 2, %s12
      // Predicated region
      $region37: #{tpu_custom_call.1} parent=5 // pred_check
        %p436 = pneg %p435
      $region38: #{tpu_custom_call.1} parent=5 // pred_check_branch
        %438 = sbr.rel (%p436) target = $region40
      $region39: #{tpu_custom_call.1} parent=5 // pred_region
        %s439 = ssub.s32 %s12, 2
        // Predicated region
        $region41: #{tpu_custom_call.1} parent=39 // pred_check
          %p440 = pneg %p109
        $region42: #{tpu_custom_call.1} parent=39 // pred_check_branch
          %442 = sbr.rel (%p440) target = $region44
        $region43: #{tpu_custom_call.1} parent=39 // pred_region
          %s443 = sand.u32 %s94, 1
          %s444 = scalar_lea.sflag [#allocation3], %s443
          %s445 = sand.u32 %s94, 1
          %s446 = smul.addr %s445, 8
          %s447 = scalar_lea.vmem [#allocation2], %s446
          %448 = dma.done %s444, 128
        $region44: #{tpu_custom_call.1} parent=39 // pred_fallthru
          _
      $region40: #{tpu_custom_call.1} parent=5 // pred_fallthru
        _
    $region6: #{tpu_custom_call.1} parent=1 // loop_footer
      %s16 = sadd.s32 1, %s12
    $region7: #{tpu_custom_call.1} parent=1 // loop_footer_branch
      %11 = sbr.rel target = $region3
    $region8: #{tpu_custom_call.1} parent=1 // loop_exit
      _
    %449 = vsyncpa [#allocation3], 1
    %s450 = scalar_lea.sflag [#allocation3], 1
    %451 = vsyncpa %s450, 1

</llo_original>
